<compile_context>
chip_gen: v7x
topology: tpu7x:2x2x1
jax: 0.10.0
libtpu: 0.0.40
codegen_flags: <defaults>
</compile_context>

<pallas_src>
import functools
import math

import numpy as np
import jax
import jax.numpy as jnp
from jax.experimental import pallas as pl
from jax.experimental.pallas import tpu as pltpu


# ----------------------------------------------------------------------------
# Tiling helpers
# ----------------------------------------------------------------------------
def _round_up(x, m):
    return ((x + m - 1) // m) * m


def _pick_tile(n, tile_n):
    """128-aligned tile along N; keep >=2 grid steps when possible so the
    'parallel' axis can shard across both TensorCores on v7x."""
    tile_n = max(128, _round_up(int(tile_n), 128))
    half = max(128, _round_up((int(n) + 1) // 2, 128))
    return min(tile_n, half)


# ----------------------------------------------------------------------------
# Kernels
# ----------------------------------------------------------------------------
def _pe_lane_major_kernel(scale_ref, phase_ref, pos_ref, out_ref):
    # pos: (1, T) lane-dense; scale/phase: (2L, 1) resident constants.
    # Row 2i = sin(pos * pi * b^i), row 2i+1 = cos(...) via sin(x + pi/2)
    # (one transcendental per output element).
    out_ref[...] = jnp.sin(
        pos_ref[...] * scale_ref[...] + phase_ref[...]).astype(out_ref.dtype)


def _pe_row_major_kernel(scale_ref, phase_ref, pos_ref, out_ref):
    # pos: (T, 1); scale/phase: (1, 2L); out: (T, 2L) -- torch layout, emitted
    # directly from the kernel (no whole-output transpose pass).
    out_ref[...] = jnp.sin(
        pos_ref[...] * scale_ref[...] + phase_ref[...]).astype(out_ref.dtype)


def _pe_stem_fused_kernel(scale_ref, phase_ref, pos_ref, w_ref, b_ref, out_ref,
                          *, act):
    # PE generated in VMEM and immediately contracted with the (H, 2L)
    # torch-layout Linear weight on the MXU; output (H, T) lane-dense.
    pe = jnp.sin(pos_ref[...] * scale_ref[...] + phase_ref[...])        # (2L, T)
    acc = jnp.dot(w_ref[...], pe, preferred_element_type=jnp.float32)   # (H, T)
    acc = acc + b_ref[...]
    if act == "ReLU":
        acc = jnp.maximum(acc, 0.0)
    elif act == "GELU":
        acc = jax.nn.gelu(acc)
    else:
        raise NotImplementedError(f"act: {act}")
    out_ref[...] = acc.astype(out_ref.dtype)


# ----------------------------------------------------------------------------
# pallas_call wrappers
# ----------------------------------------------------------------------------
def pe_lane_major(pos, scale, phase, *, tile_n=32768, out_dtype=jnp.float32):
    """Positional encoding in the lane-dense (2L, N) layout (preferred)."""
    pos = jnp.asarray(pos, jnp.float32).reshape(-1)
    n = int(pos.shape[0])
    two_l = int(scale.shape[0])
    tile = _pick_tile(n, tile_n)
    steps = pl.cdiv(n, tile)
    out_bytes = int(np.dtype(out_dtype).itemsize) * n * two_l
    return pl.pallas_call(
        _pe_lane_major_kernel,
        out_shape=jax.ShapeDtypeStruct((two_l, n), out_dtype),
        grid=(steps,),
        in_specs=[
            pl.BlockSpec((two_l, 1), lambda i: (0, 0)),   # scale, resident
            pl.BlockSpec((two_l, 1), lambda i: (0, 0)),   # phase, resident
            pl.BlockSpec((1, tile), lambda i: (0, i)),    # positions
        ],
        out_specs=pl.BlockSpec((two_l, tile), lambda i: (0, i)),
        compiler_params=pltpu.CompilerParams(
            dimension_semantics=("parallel",)),
        cost_estimate=pl.CostEstimate(
            flops=2 * n * two_l,
            transcendentals=n * two_l,
            bytes_accessed=4 * n + out_bytes),
    )(scale.reshape(two_l, 1), phase.reshape(two_l, 1), pos.reshape(1, n))


def pe_row_major(pos, scale, phase, *, tile_n=2048, out_dtype=jnp.float32):
    """Positional encoding emitted directly in torch (N, 2L) layout.

    Modest tile: a (tile, 2L) block pads its 2L lanes up to 128 in VMEM, so huge
    tiles would waste VMEM; the masked stores are the bounded price of the
    (N, 2L) HBM layout (still a single HBM pass, no transpose).
    """
    pos = jnp.asarray(pos, jnp.float32).reshape(-1)
    n = int(pos.shape[0])
    two_l = int(scale.shape[0])
    tile = min(_pick_tile(n, tile_n), 4096)
    steps = pl.cdiv(n, tile)
    return pl.pallas_call(
        _pe_row_major_kernel,
        out_shape=jax.ShapeDtypeStruct((n, two_l), out_dtype),
        grid=(steps,),
        in_specs=[
            pl.BlockSpec((1, two_l), lambda i: (0, 0)),
            pl.BlockSpec((1, two_l), lambda i: (0, 0)),
            pl.BlockSpec((tile, 1), lambda i: (i, 0)),
        ],
        out_specs=pl.BlockSpec((tile, two_l), lambda i: (i, 0)),
        compiler_params=pltpu.CompilerParams(
            dimension_semantics=("parallel",)),
        cost_estimate=pl.CostEstimate(
            flops=2 * n * two_l,
            transcendentals=n * two_l,
            bytes_accessed=4 * n + int(np.dtype(out_dtype).itemsize) * n * two_l),
    )(scale.reshape(1, two_l), phase.reshape(1, two_l), pos.reshape(n, 1))


def pe_stem_first_layer(pos, w, b, scale, phase, *, act="ReLU",
                        tile_n=4096, out_dtype=jnp.float32):
    """Fused PE + first stem Linear (+activation).

    w is the torch nn.Linear weight, shape (H, 2L); b is (H,).  Output is the
    lane-dense (H, N) activation (features along sublanes, positions along
    lanes), ready for the next stem layer as a plain (H_next, H) @ (H, N) matmul.
    """
    pos = jnp.asarray(pos, jnp.float32).reshape(-1)
    n = int(pos.shape[0])
    h, two_l = int(w.shape[0]), int(w.shape[1])
    assert int(scale.shape[0]) == two_l
    tile = _pick_tile(n, tile_n)
    steps = pl.cdiv(n, tile)
    kernel = functools.partial(_pe_stem_fused_kernel, act=act)
    return pl.pallas_call(
        kernel,
        out_shape=jax.ShapeDtypeStruct((h, n), out_dtype),
        grid=(steps,),
        in_specs=[
            pl.BlockSpec((two_l, 1), lambda i: (0, 0)),   # scale, resident
            pl.BlockSpec((two_l, 1), lambda i: (0, 0)),   # phase, resident
            pl.BlockSpec((1, tile), lambda i: (0, i)),    # positions
            pl.BlockSpec((h, two_l), lambda i: (0, 0)),   # Linear weight, resident
            pl.BlockSpec((h, 1), lambda i: (0, 0)),       # bias, resident
        ],
        out_specs=pl.BlockSpec((h, tile), lambda i: (0, i)),
        compiler_params=pltpu.CompilerParams(
            dimension_semantics=("parallel",)),
        cost_estimate=pl.CostEstimate(
            flops=2 * n * two_l * (h + 1),
            transcendentals=n * two_l,
            bytes_accessed=4 * (n + h * (two_l + 1))
                           + int(np.dtype(out_dtype).itemsize) * h * n),
    )(scale.reshape(two_l, 1), phase.reshape(two_l, 1), pos.reshape(1, n),
      jnp.asarray(w, jnp.float32), jnp.asarray(b, jnp.float32).reshape(h, 1))


# ----------------------------------------------------------------------------
# Module wrapper (torch PositionalEncoding semantics)
# ----------------------------------------------------------------------------
class PositionalEncodingPallas:
    """JAX/Pallas port of ZIP's PositionalEncoding (ZIP.pe)."""

    def __init__(self, pe_embed_b, pe_embed_l, *, tile_n=32768,
                 out_dtype=jnp.float32, min_pallas_n=4096):
        if pe_embed_b == 0:
            self.embed_length = 1
            self.pe_embed = False
            return
        self.lbase = float(pe_embed_b)
        self.levels = int(float(pe_embed_l))
        self.embed_length = 2 * self.levels
        self.pe_embed = True
        self.tile_n = int(tile_n)
        self.out_dtype = out_dtype
        self.min_pallas_n = int(min_pallas_n)
        # Exact host-side float64 constants: scale[2i] = scale[2i+1] = pi * b**i,
        # phase alternates 0 / pi/2 so that cos(x) == sin(x + pi/2).
        per_level = np.pi * (self.lbase ** np.arange(self.levels, dtype=np.float64))
        self._scale = jnp.asarray(np.repeat(per_level, 2), jnp.float32)
        self._phase = jnp.asarray(
            np.tile(np.array([0.0, np.pi / 2.0], dtype=np.float64), self.levels),
            jnp.float32)

    def __call__(self, pos):
        """Torch-layout output (N, 2L) -- matches PositionalEncoding.forward."""
        pos = jnp.asarray(pos, jnp.float32).reshape(-1)
        if not self.pe_embed:
            return pos[:, None]
        n = int(pos.shape[0])
        if n < self.min_pallas_n:
            # ZIP calls PE with tiny coordinate vectors; plain jnp fuses better
            # than a padded single-step pallas_call + layout plumbing.
            return jnp.sin(pos[:, None] * self._scale[None, :]
                           + self._phase[None, :]).astype(self.out_dtype)
        # (N, 2L) truly required in HBM -> emit it directly from the kernel
        # (single HBM pass, no whole-output transpose).
        return pe_row_major(pos, self._scale, self._phase,
                            tile_n=min(self.tile_n, 2048),
                            out_dtype=self.out_dtype)

    def lane_major(self, pos):
        """Lane-dense (2L, N) output -- preferred layout; feed the stem matmul
        via dot_general (operand transpose is free on the MXU)."""
        pos = jnp.asarray(pos, jnp.float32).reshape(-1)
        if not self.pe_embed:
            return pos[None, :]
        return pe_lane_major(pos, self._scale, self._phase,
                             tile_n=self.tile_n, out_dtype=self.out_dtype)


# ----------------------------------------------------------------------------
# Pure-JAX reference (mirrors the torch loop exactly)
# ----------------------------------------------------------------------------
def _reference(pos, lbase, levels):
    cols = []
    for i in range(levels):
        t = pos * (lbase ** i) * math.pi
        cols += [jnp.sin(t), jnp.cos(t)]
    return jnp.stack(cols, 1)


if __name__ == "__main__":
    key = jax.random.PRNGKey(0)
    k1, k2, k3, k4, k5 = jax.random.split(key, 5)

    B, L = 1.25, 4
    TWO_L = 2 * L

    # Case 1: torch-semantics path, tiny N -> plain-jnp fast path.
    n1 = 16
    pos1 = jax.random.uniform(k1, (n1,), dtype=jnp.float32)
    pe = PositionalEncodingPallas(B, L)
    out1 = jax.block_until_ready(pe(pos1))
    ref1 = _reference(pos1, B, L)
    assert out1.shape == (n1, TWO_L)
    assert jnp.allclose(out1, ref1, atol=1e-4), "mismatch (case 1: jnp fast path)"

    # Case 2: lane-major Pallas kernel, ragged N, multi-step grid.
    n2 = 600
    pos2 = jax.random.uniform(k2, (n2,), dtype=jnp.float32)
    pe2 = PositionalEncodingPallas(B, L, tile_n=256)
    out2 = jax.block_until_ready(pe2.lane_major(pos2))
    ref2 = _reference(pos2, B, L)
    assert out2.shape == (TWO_L, n2)
    assert jnp.allclose(out2, ref2.T, atol=1e-4), "mismatch (case 2: lane-major)"

    # Case 3: torch-layout (N, 2L) emitted directly by the row-major kernel.
    pe3 = PositionalEncodingPallas(B, L, tile_n=256, min_pallas_n=0)
    out3 = jax.block_until_ready(pe3(pos2))
    assert out3.shape == (n2, TWO_L)
    assert jnp.allclose(out3, ref2, atol=1e-4), "mismatch (case 3: row-major)"

    # Case 4: default-style big tiles + bf16 output (multi-step grid).
    n4 = 40000
    pos4 = jax.random.uniform(k3, (n4,), dtype=jnp.float32)
    pe4 = PositionalEncodingPallas(B, L, tile_n=16384, out_dtype=jnp.bfloat16)
    out4 = jax.block_until_ready(pe4.lane_major(pos4))
    ref4 = _reference(pos4, B, L)
    assert out4.shape == (TWO_L, n4) and out4.dtype == jnp.bfloat16
    assert jnp.allclose(out4.astype(jnp.float32), ref4.T, atol=2e-2), \
        "mismatch (case 4: bf16)"

    # Case 5: fused PE + first stem Linear (+ReLU); weight in torch (H, 2L) layout.
    H = 256
    w1 = jax.random.normal(k4, (H, TWO_L), dtype=jnp.float32) * 0.25
    b1 = jax.random.normal(k5, (H,), dtype=jnp.float32) * 0.1
    out5 = jax.block_until_ready(
        pe_stem_first_layer(pos2, w1, b1, pe2._scale, pe2._phase,
                            act="ReLU", tile_n=256))
    ref5 = jnp.maximum(ref2 @ w1.T + b1[None, :], 0.0).T       # (H, n2)
    assert out5.shape == (H, n2)
    # Tolerance covers single-pass bf16 MXU rounding on either side.
    assert jnp.allclose(out5, ref5, atol=1e-1), "mismatch (case 5: fused stem)"

    # Case 6: pe_embed disabled branch.
    pe_off = PositionalEncodingPallas(0, 0)
    out_off = jax.block_until_ready(pe_off(pos1))
    assert out_off.shape == (n1, 1)

    print("KERNEL_OK")
</pallas_src>

<mosaic_0001>
module attributes {stable_mosaic.version = 11 : i64} {
  func.func @_pe_lane_major_kernel(%arg0: i32, %arg1: memref<8x1xf32, #tpu.memory_space<vmem>>, %arg2: memref<8x1xf32, #tpu.memory_space<vmem>>, %arg3: memref<1x256xf32, #tpu.memory_space<vmem>>, %arg4: memref<8x256xf32, #tpu.memory_space<vmem>>) attributes {dimension_semantics = [#tpu.dimension_semantics<parallel>], iteration_bounds = array<i64: 3>, scalar_prefetch = 0 : i64, scratch_operands = 0 : i64, tpu.core_type = #tpu.core_type<tc>, window_params = [{pipeline_mode = #tpu.pipeline_mode<synchronous>, transform_indices = @transform_0, window_bounds = array<i64: 8, 1>}, {pipeline_mode = #tpu.pipeline_mode<synchronous>, transform_indices = @transform_1, window_bounds = array<i64: 8, 1>}, {transform_indices = @transform_2, window_bounds = array<i64: 1, 256>}, {transform_indices = @transform_3, window_bounds = array<i64: 8, 256>}]} {
    %c0 = arith.constant 0 : index
    %c0_0 = arith.constant 0 : index
    %0 = vector.load %arg3[%c0, %c0_0] : memref<1x256xf32, #tpu.memory_space<vmem>>, vector<1x256xf32>
    %c0_1 = arith.constant 0 : index
    %c0_2 = arith.constant 0 : index
    %1 = vector.load %arg1[%c0_1, %c0_2] : memref<8x1xf32, #tpu.memory_space<vmem>>, vector<8x1xf32>
    %2 = vector.broadcast %0 : vector<1x256xf32> to vector<8x256xf32>
    %3 = vector.broadcast %1 : vector<8x1xf32> to vector<8x256xf32>
    %4 = arith.mulf %2, %3 : vector<8x256xf32>
    %c0_3 = arith.constant 0 : index
    %c0_4 = arith.constant 0 : index
    %5 = vector.load %arg2[%c0_3, %c0_4] : memref<8x1xf32, #tpu.memory_space<vmem>>, vector<8x1xf32>
    %6 = vector.broadcast %5 : vector<8x1xf32> to vector<8x256xf32>
    %7 = arith.addf %4, %6 : vector<8x256xf32>
    %8 = math.sin %7 : vector<8x256xf32>
    %c0_5 = arith.constant 0 : index
    %c0_6 = arith.constant 0 : index
    %9 = vector.load %arg4[%c0_5, %c0_6] : memref<8x256xf32, #tpu.memory_space<vmem>>, vector<8x256xf32>
    tpu.vector_store %arg4[%c0_5, %c0_6], %8 {strides = array<i32>} : memref<8x256xf32, #tpu.memory_space<vmem>>, vector<8x256xf32>,
    return
  }
  func.func @transform_0(%arg0: i32) -> (i32, i32) {
    %c0_i32 = arith.constant 0 : i32
    %c0_i32_0 = arith.constant 0 : i32
    %c0_i32_1 = arith.constant 0 : i32
    return %c0_i32, %c0_i32_0 : i32, i32
  }
  func.func @transform_1(%arg0: i32) -> (i32, i32) {
    %c0_i32 = arith.constant 0 : i32
    %c0_i32_0 = arith.constant 0 : i32
    %c0_i32_1 = arith.constant 0 : i32
    return %c0_i32, %c0_i32_0 : i32, i32
  }
  func.func @transform_2(%arg0: i32) -> (i32, i32) {
    %c0_i32 = arith.constant 0 : i32
    %c0_i32_0 = arith.constant 0 : i32
    return %c0_i32, %arg0 : i32, i32
  }
  func.func @transform_3(%arg0: i32) -> (i32, i32) {
    %c0_i32 = arith.constant 0 : i32
    %c0_i32_0 = arith.constant 0 : i32
    return %c0_i32, %arg0 : i32, i32
  }
}

</mosaic_0001>

<llo_original>
// kernel: tpu_custom_call.1
$region0: #{tpu_custom_call.1}
  #allocation0 [shape = 'u32[]', space=smem, size = 0x4, offset = 0x4, fixed_abs, tag = 'smem constant byte address 0x4 - core index']
  #allocation1 [shape = 'u32[144,128]{1,0:T(1,128)}', space=vmem, size = 0x12000, scoped, tag = 'internal scratch']
  %s0 = inlined_call_operand.vmem [shape: f32[8,1], index: 0, kind: input, shape index: {}]
  %s1 = inlined_call_operand.vmem [shape: f32[8,1], index: 1, kind: input, shape index: {}]
  %s2 = inlined_call_operand.vmem [shape: f32[1,600], index: 2, kind: input, shape index: {}]
  %s3 = inlined_call_operand.hbm [shape: f32[8,600], index: 3, kind: output, shape index: {}]
  %s4 = sld [smem:[#allocation0]]
  $region45: #{tpu_custom_call.1} parent=0
    _
  %s6 = ssub.s32 1, %s4
  %s7 = scalar_select 0, %s6, %s4
  $region1: #{tpu_custom_call.1} parent=0
    #allocation2 [shape = 'u8[16384]{0}', space=vmem, size = 0x4000, scoped, tag = 'output window, operand 0']
    #allocation3 [shape = 's32[2]{0}', space=sflag, size = 0x8, scoped, tag = 'scoped memory for tpu_custom_call.1']
    %8 = vsyncpa [#allocation3], 0
    %s9 = scalar_lea.sflag [#allocation3], 1
    %10 = vsyncpa %s9, 0
    loop: start=0, step=1, limit=5
    $region2: #{tpu_custom_call.1} parent=1 // loop_pre_header
      _
    $region3: #{tpu_custom_call.1} parent=1 // loop_header
      %s12 = sphi 0, %s16
      %p13 = scmp.ge.s32.totalorder %s12, 5
      %s20 = sphi 0, %s20
      %s22 = sphi 0, %s20
      %s23 = sphi 0, %s22
      %s37 = sphi 0, %s23
      %s41 = sphi 0, %s41
      %s43 = sphi 0, %s41
      %s44 = sphi 0, %s43
      %s58 = sphi 0, %s44
      %s64 = sphi 0, %s66
      %s67 = sphi 0, %s64
      %s68 = sphi 0, %s67
      %s84 = sphi 0, %s68
      %s90 = sphi 0, %s92
      %s93 = sphi 0, %s90
      %s94 = sphi 0, %s93
      %s110 = sphi 0, %s94
    $region4: #{tpu_custom_call.1} parent=1 // loop_header_branch
      %15 = sbr.rel (%p13) target = $region8
    $region5: #{tpu_custom_call.1} parent=1 // loop_body
      %s17 = ssub.s32 %s12, 1
      %s18 = ssub.s32 %s12, 2
      %s19 = sadd.s32 %s12, 1
      %s21 = sadd.s32 %s20, 1
      %p24 = scmp.eq.s32.totalorder %s12, 2
      %p25 = scmp.ne.s32.totalorder %s20, %s22
      %p26 = scmp.eq.s32.totalorder %s12, 0
      %p27 = por %p25, %p26
      %p28 = scmp.ne.s32.totalorder %s20, %s22
      %p29 = scmp.eq.s32.totalorder %s17, 2
      %p30 = por %p28, %p29
      %p31 = scmp.ne.s32.totalorder %s22, %s23
      %p32 = scmp.eq.s32.totalorder %s17, 0
      %p33 = por %p31, %p32
      %p34 = scmp.ne.s32.totalorder %s22, %s23
      %p35 = scmp.eq.s32.totalorder %s18, 2
      %p36 = por %p34, %p35
      %p38 = scmp.ne.s32.totalorder %s23, %s37
      %p39 = scmp.eq.s32.totalorder %s18, 0
      %p40 = por %p38, %p39
      %s42 = sadd.s32 %s41, 1
      %p45 = scmp.eq.s32.totalorder %s12, 2
      %p46 = scmp.ne.s32.totalorder %s41, %s43
      %p47 = scmp.eq.s32.totalorder %s12, 0
      %p48 = por %p46, %p47
      %p49 = scmp.ne.s32.totalorder %s41, %s43
      %p50 = scmp.eq.s32.totalorder %s17, 2
      %p51 = por %p49, %p50
      %p52 = scmp.ne.s32.totalorder %s43, %s44
      %p53 = scmp.eq.s32.totalorder %s17, 0
      %p54 = por %p52, %p53
      %p55 = scmp.ne.s32.totalorder %s43, %s44
      %p56 = scmp.eq.s32.totalorder %s18, 2
      %p57 = por %p55, %p56
      %p59 = scmp.ne.s32.totalorder %s44, %s58
      %p60 = scmp.eq.s32.totalorder %s18, 0
      %p61 = por %p59, %p60
      %s62 = ssub.s32 %s12, %s19
      %p63 = scmp.eq.s32.totalorder %s62, 0
      %s65 = sadd.s32 %s64, 1
      %s66 = scalar_select %p63, %s64, %s65
      %p69 = pneg %p63
      %p70 = scmp.eq.s32.totalorder %s12, 2
      %p71 = por %p69, %p70
      %p72 = scmp.ne.s32.totalorder %s64, %s67
      %p73 = scmp.eq.s32.totalorder %s12, 0
      %p74 = por %p72, %p73
      %p75 = scmp.ne.s32.totalorder %s64, %s67
      %p76 = scmp.eq.s32.totalorder %s17, 2
      %p77 = por %p75, %p76
      %p78 = scmp.ne.s32.totalorder %s67, %s68
      %p79 = scmp.eq.s32.totalorder %s17, 0
      %p80 = por %p78, %p79
      %p81 = scmp.ne.s32.totalorder %s67, %s68
      %p82 = scmp.eq.s32.totalorder %s18, 2
      %p83 = por %p81, %p82
      %p85 = scmp.ne.s32.totalorder %s68, %s84
      %p86 = scmp.eq.s32.totalorder %s18, 0
      %p87 = por %p85, %p86
      %s88 = ssub.s32 %s12, %s19
      %p89 = scmp.eq.s32.totalorder %s88, 0
      %s91 = sadd.s32 %s90, 1
      %s92 = scalar_select %p89, %s90, %s91
      %p95 = pneg %p89
      %p96 = scmp.eq.s32.totalorder %s12, 2
      %p97 = por %p95, %p96
      %p98 = scmp.ne.s32.totalorder %s90, %s93
      %p99 = scmp.eq.s32.totalorder %s12, 0
      %p100 = por %p98, %p99
      %p101 = scmp.ne.s32.totalorder %s90, %s93
      %p102 = scmp.eq.s32.totalorder %s17, 2
      %p103 = por %p101, %p102
      %p104 = scmp.ne.s32.totalorder %s93, %s94
      %p105 = scmp.eq.s32.totalorder %s17, 0
      %p106 = por %p104, %p105
      %p107 = scmp.ne.s32.totalorder %s93, %s94
      %p108 = scmp.eq.s32.totalorder %s18, 2
      %p109 = por %p107, %p108
      %p111 = scmp.ne.s32.totalorder %s94, %s110
      %p112 = scmp.eq.s32.totalorder %s18, 0
      %p113 = por %p111, %p112
      %p114 = scmp.le.s32.totalorder 1, %s12
      %p115 = scmp.lt.s32.totalorder %s12, 4
      %p116 = pnand %p114, %p115
      %p117 = pneg %p116
      // Predicated region
      $region9: #{tpu_custom_call.1} parent=5 // pred_check
        _
      $region10: #{tpu_custom_call.1} parent=5 // pred_check_branch
        %119 = sbr.rel (%p116) target = $region12
      $region11: #{tpu_custom_call.1} parent=5 // pred_region
        %s120 = ssub.s32 %s12, 1
        // Predicated region
        $region13: #{tpu_custom_call.1} parent=11 // pred_check
          %p121 = pneg %p33
        $region14: #{tpu_custom_call.1} parent=11 // pred_check_branch
          %123 = sbr.rel (%p121) target = $region16
        $region15: #{tpu_custom_call.1} parent=11 // pred_region
          _
        $region16: #{tpu_custom_call.1} parent=11 // pred_fallthru
          _
        // Predicated region
        $region17: #{tpu_custom_call.1} parent=11 // pred_check
          %p124 = pneg %p54
        $region18: #{tpu_custom_call.1} parent=11 // pred_check_branch
          %126 = sbr.rel (%p124) target = $region20
        $region19: #{tpu_custom_call.1} parent=11 // pred_region
          _
        $region20: #{tpu_custom_call.1} parent=11 // pred_fallthru
          _
      $region12: #{tpu_custom_call.1} parent=5 // pred_fallthru
        _
      %p127 = scmp.lt.s32.totalorder %s12, 3
      // Predicated region
      $region21: #{tpu_custom_call.1} parent=5 // pred_check
        %p128 = pneg %p127
      $region22: #{tpu_custom_call.1} parent=5 // pred_check_branch
        %130 = sbr.rel (%p128) target = $region24
      $region23: #{tpu_custom_call.1} parent=5 // pred_region
        // Predicated region
        $region25: #{tpu_custom_call.1} parent=23 // pred_check
          %p131 = pneg %p74
        $region26: #{tpu_custom_call.1} parent=23 // pred_check_branch
          %133 = sbr.rel (%p131) target = $region28
        $region27: #{tpu_custom_call.1} parent=23 // pred_region
          %s134 = smul.u32 2, %s12
          %s135 = ssub.s32 5, %s134
          %p136 = scmp.lt.s32.totalorder %s135, 2
          %s137 = scalar_select %p136, %s135, 2
          %s138 = smul.u32 16, %s137
          %p139 = scmp.lt.s32.totalorder %s134, 4
          %s140 = scalar_select %p139, %s134, 4
          %s141 = scalar_lea.vmem %s2, %s140
          %s142 = smul.u32 2, %s12
          %s143 = ssub.s32 5, %s142
          %p144 = scmp.lt.s32.totalorder %s143, 2
          %s145 = scalar_select %p144, %s143, 2
          %s146 = smul.u32 16, %s145
        $region28: #{tpu_custom_call.1} parent=23 // pred_fallthru
          _
      $region24: #{tpu_custom_call.1} parent=5 // pred_fallthru
        _
      %p147 = scmp.le.s32.totalorder 1, %s12
      %p148 = scmp.lt.s32.totalorder %s12, 4
      %p149 = pnand %p147, %p148
      %p150 = pneg %p149
      // Predicated region
      $region29: #{tpu_custom_call.1} parent=5 // pred_check
        _
      $region30: #{tpu_custom_call.1} parent=5 // pred_check_branch
        %152 = sbr.rel (%p149) target = $region32
      $region31: #{tpu_custom_call.1} parent=5 // pred_region
        %s153 = ssub.s32 %s12, 1
        %p154 = pneg %p33
        %p155 = pneg %p30
        %p156 = pneg %p54
        %p157 = pneg %p51
        %s158 = smul.u32 2, %s17
        %s159 = ssub.s32 5, %s158
        %p160 = scmp.lt.s32.totalorder %s159, 2
        %s161 = scalar_select %p160, %s159, 2
        %s162 = smul.u32 16, %s161
        %p163 = scmp.lt.s32.totalorder %s158, 4
        %s164 = scalar_select %p163, %s158, 4
        %s165 = scalar_lea.vmem %s2, %s164
        %p166 = pneg %p80
        %p167 = pneg %p77
        %p168 = pneg %p106
        %p169 = pneg %p103
        %s170 = sand.u32 %s93, 1
        %s171 = scalar_lea.sflag [#allocation3], %s170
        %s172 = sand.u32 %s93, 1
        %s173 = smul.addr %s172, 16
        %s174 = scalar_lea.vmem [#allocation2], %s173
        %s175 = smul.u32 2, %s17
        %s176 = ssub.s32 5, %s175
        %p177 = scmp.lt.s32.totalorder %s176, 2
        %s178 = scalar_select %p177, %s176, 2
        %s179 = smul.u32 16, %s178
        %p180 = scmp.lt.s32.totalorder %s175, 4
        %s181 = scalar_select %p180, %s175, 4
        %s182 = scalar_lea.vmem %s2, %s181
        %s183 = smul.u32 2, %s17
        %s184 = ssub.s32 5, %s183
        %p185 = scmp.lt.s32.totalorder %s184, 2
        %s186 = scalar_select %p185, %s184, 2
        %s187 = smul.u32 16, %s186
        %s188 = smul.u32 2, %s17
        %s189 = ssub.s32 5, %s188
        %p190 = scmp.lt.s32.totalorder %s189, 2
        %s191 = scalar_select %p190, %s189, 2
        %s192 = smul.u32 128, %s191
        %v193 = vld [vmem:[%s182] sm:$0x3]
        %v194 = vld [vmem:[%s0] sm:$0xff]
        %v196 = vlaneseq
        %v197 = vshrl.u32 %v196, 7
        %v198 = vsub.s32 0, %v197
        %v199 = vrot.slane %v193, %v198
        %v200 = vlaneseq
        %v201 = vshrl.u32 %v200, 7
        %v202 = vsub.s32 1, %v201
        %v203 = vrot.slane %v193, %v202
        %207 = vset.pattern.permute.xlu0 0
        %208 = vperm.xlu0 %207, %v194
        %v209 = vpop.permute.xlu0 %208
        %v211 = vmul.f32 %v199, %v209
        %v212 = vmul.f32 %v203, %v209
        %v213 = vld [vmem:[%s1] sm:$0xff]
        %215 = vset.pattern.permute.xlu0 0
        %216 = vperm.xlu0 %215, %v213
        %v217 = vpop.permute.xlu0 %216
        %v219 = vadd.f32 %v211, %v217
        %v220 = vadd.f32 %v212, %v217
        %v221 = vand.u32 2147483647, %v219
        %vm222 = vcmp.le.f32.partialorder %v221, 0.7853982
        %vm223 = vcmp.lt.s32.totalorder %v219, 0
        %v224 = vand.u32 %v219, 2139095040
        %v225 = vshrl.u32 %v224, 23
        %v226 = vsub.s32 %v225, 127
        %v227 = vand.u32 2147483647, %v219
        %v228 = vand.u32 %v227, 8388607
        %v229 = vor.u32 %v228, 8388608
        %v230 = vsub.s32 0, %v229
        %v231 = vadd.s32 %v226, 1
        %vm232 = vcmp.gt.s32.totalorder %v231, 0
        %v233 = vsel %vm232, %v231, 0
        %v234 = vshrl.u32 %v233, 5
        %v235 = vand.u32 %v233, 31
        %v236 = vsub.s32 32, %v235
        %v237 = vshrl.u32 683565275, %v236
        %v238 = vshll.u32 683565275, %v235
        %v239 = vshrl.u32 2475754826, %v236
        %v240 = vor.u32 %v238, %v239
        %v241 = vshll.u32 2475754826, %v235
        %v242 = vshrl.u32 2131351028, %v236
        %v243 = vor.u32 %v241, %v242
        %v244 = vshll.u32 2131351028, %v235
        %v245 = vshrl.u32 2102212464, %v236
        %v246 = vor.u32 %v244, %v245
        %v247 = vshll.u32 2102212464, %v235
        %v248 = vshrl.u32 920167782, %v236
        %v249 = vor.u32 %v247, %v248
        %v250 = vshll.u32 920167782, %v235
        %v251 = vshrl.u32 1326507024, %v236
        %v252 = vor.u32 %v250, %v251
        %vm253 = vcmp.lt.s32.totalorder %v234, 1
        %vm254 = vcmp.lt.s32.totalorder %v234, 2
        %vm255 = vcmp.lt.s32.totalorder %v234, 3
        %vm256 = vcmp.lt.s32.totalorder %v234, 4
        %v257 = vsel %vm253, %v237, %v240
        %v258 = vsel %vm256, %v246, 2102212464
        %v259 = vsel %vm255, %v243, %v258
        %v260 = vsel %vm254, %v257, %v259
        %v261 = vsel %vm253, %v240, %v243
        %v262 = vsel %vm256, %v249, 920167782
        %v263 = vsel %vm255, %v246, %v262
        %v264 = vsel %vm254, %v261, %v263
        %v265 = vsel %vm253, %v243, %v246
        %v266 = vsel %vm256, %v252, 1326507024
        %v267 = vsel %vm255, %v249, %v266
        %v268 = vsel %vm254, %v265, %v267
        %v269 = vshll.u32 %v229, 8
        %v270 = vmul.u32.u64.compose %v269, %v268
        %v271 = vextract.low.u32 %v270
        %v272 = vextract.high.u32 %v270
        %v273 = vmul.u32.u64.compose %v269, %v264
        %v274 = vextract.low.u32 %v273
        %v275 = vextract.high.u32 %v273
        %v276 = vmul.u32 %v269, %v260
        %v277 = vadd.s32 %v272, %v274
        %vm278 = vc.u32 %v272, %v274
        %v279 = vadd.s32 %v275, 1
        %v280 = vsel %vm278, %v279, %v275
        %v281 = vadd.s32 %v276, %v280
        %v282 = vadd.s32 %v281, 536870912
        %v283 = vshrl.u32 %v282, 30
        %v284 = vshll.u32 %v283, 30
        %v285 = vsub.s32 %v281, %v284
        %vm286 = vcmp.lt.s32.totalorder %v285, 0
        %v287 = vsub.s32 0, %v285
        %v288 = vsel %vm286, %v287, %v285
        %v289 = vclz %v288
        %v290 = vsub.s32 %v289, 2
        %vm291 = vcmp.gt.s32.totalorder 0, %v290
        %v292 = vsel %vm291, 0, %v290
        %v293 = vsub.s32 32, %v292
        %v294 = vshll.u32 %v285, %v292
        %v295 = vshrl.u32 %v277, %v293
        %v296 = vor.u32 %v294, %v295
        %v297 = vsub.s32 4294967266, %v292
        %v298 = vadd.s32 %v297, 127
        %v299 = vshll.u32 %v298, 23
        %v300 = vor.u32 4788187, %v299
        %v301 = vand.u32 2147483647, %v300
        %v303 = vcvt.s32.f32 %v296
        %v304 = vmul.f32 %v303, %v301
        %v305 = vxor.u32 %v304, 2147483648
        %v306 = vsel %vm223, %v305, %v304
        %v307 = vsub.s32 4, %v283
        %v308 = vsel %vm223, %v307, %v283
        %v309 = vsel %vm222, %v219, %v306
        %v310 = vsel %vm222, 0, %v308
        %v311 = vcosq.f32.pop %v309
        %v312 = vsinq.f32.pop %v309
        %vm313 = vweird.f32 %v219
        %v314 = vadd.s32 %v310, 3
        %v315 = vand.u32 %v314, 3
        %vm316 = vcmp.lt.s32.totalorder %v315, 2
        %vm317 = vcmp.eq.s32.totalorder %v315, 0
        %v318 = vxor.u32 %v312, 2147483648
        %v319 = vsel %vm317, %v311, %v318
        %vm320 = vcmp.eq.s32.totalorder %v315, 2
        %v321 = vxor.u32 %v311, 2147483648
        %v322 = vsel %vm320, %v321, %v312
        %v323 = vsel %vm316, %v319, %v322
        %v324 = vsel %vm313, nan, %v323
        %v325 = vand.u32 2147483647, %v220
        %vm326 = vcmp.le.f32.partialorder %v325, 0.7853982
        %vm327 = vcmp.lt.s32.totalorder %v220, 0
        %v328 = vand.u32 %v220, 2139095040
        %v329 = vshrl.u32 %v328, 23
        %v330 = vsub.s32 %v329, 127
        %v331 = vand.u32 2147483647, %v220
        %v332 = vand.u32 %v331, 8388607
        %v333 = vor.u32 %v332, 8388608
        %v334 = vsub.s32 0, %v333
        %v335 = vadd.s32 %v330, 1
        %vm336 = vcmp.gt.s32.totalorder %v335, 0
        %v337 = vsel %vm336, %v335, 0
        %v338 = vshrl.u32 %v337, 5
        %v339 = vand.u32 %v337, 31
        %v340 = vsub.s32 32, %v339
        %v341 = vshrl.u32 683565275, %v340
        %v342 = vshll.u32 683565275, %v339
        %v343 = vshrl.u32 2475754826, %v340
        %v344 = vor.u32 %v342, %v343
        %v345 = vshll.u32 2475754826, %v339
        %v346 = vshrl.u32 2131351028, %v340
        %v347 = vor.u32 %v345, %v346
        %v348 = vshll.u32 2131351028, %v339
        %v349 = vshrl.u32 2102212464, %v340
        %v350 = vor.u32 %v348, %v349
        %v351 = vshll.u32 2102212464, %v339
        %v352 = vshrl.u32 920167782, %v340
        %v353 = vor.u32 %v351, %v352
        %v354 = vshll.u32 920167782, %v339
        %v355 = vshrl.u32 1326507024, %v340
        %v356 = vor.u32 %v354, %v355
        %vm357 = vcmp.lt.s32.totalorder %v338, 1
        %vm358 = vcmp.lt.s32.totalorder %v338, 2
        %vm359 = vcmp.lt.s32.totalorder %v338, 3
        %vm360 = vcmp.lt.s32.totalorder %v338, 4
        %v361 = vsel %vm357, %v341, %v344
        %v362 = vsel %vm360, %v350, 2102212464
        %v363 = vsel %vm359, %v347, %v362
        %v364 = vsel %vm358, %v361, %v363
        %v365 = vsel %vm357, %v344, %v347
        %v366 = vsel %vm360, %v353, 920167782
        %v367 = vsel %vm359, %v350, %v366
        %v368 = vsel %vm358, %v365, %v367
        %v369 = vsel %vm357, %v347, %v350
        %v370 = vsel %vm360, %v356, 1326507024
        %v371 = vsel %vm359, %v353, %v370
        %v372 = vsel %vm358, %v369, %v371
        %v373 = vshll.u32 %v333, 8
        %v374 = vmul.u32.u64.compose %v373, %v372
        %v375 = vextract.low.u32 %v374
        %v376 = vextract.high.u32 %v374
        %v377 = vmul.u32.u64.compose %v373, %v368
        %v378 = vextract.low.u32 %v377
        %v379 = vextract.high.u32 %v377
        %v380 = vmul.u32 %v373, %v364
        %v381 = vadd.s32 %v376, %v378
        %vm382 = vc.u32 %v376, %v378
        %v383 = vadd.s32 %v379, 1
        %v384 = vsel %vm382, %v383, %v379
        %v385 = vadd.s32 %v380, %v384
        %v386 = vadd.s32 %v385, 536870912
        %v387 = vshrl.u32 %v386, 30
        %v388 = vshll.u32 %v387, 30
        %v389 = vsub.s32 %v385, %v388
        %vm390 = vcmp.lt.s32.totalorder %v389, 0
        %v391 = vsub.s32 0, %v389
        %v392 = vsel %vm390, %v391, %v389
        %v393 = vclz %v392
        %v394 = vsub.s32 %v393, 2
        %vm395 = vcmp.gt.s32.totalorder 0, %v394
        %v396 = vsel %vm395, 0, %v394
        %v397 = vsub.s32 32, %v396
        %v398 = vshll.u32 %v389, %v396
        %v399 = vshrl.u32 %v381, %v397
        %v400 = vor.u32 %v398, %v399
        %v401 = vsub.s32 4294967266, %v396
        %v402 = vadd.s32 %v401, 127
        %v403 = vshll.u32 %v402, 23
        %v404 = vor.u32 4788187, %v403
        %v405 = vand.u32 2147483647, %v404
        %v407 = vcvt.s32.f32 %v400
        %v408 = vmul.f32 %v407, %v405
        %v409 = vxor.u32 %v408, 2147483648
        %v410 = vsel %vm327, %v409, %v408
        %v411 = vsub.s32 4, %v387
        %v412 = vsel %vm327, %v411, %v387
        %v413 = vsel %vm326, %v220, %v410
        %v414 = vsel %vm326, 0, %v412
        %v415 = vcosq.f32.pop %v413
        %v416 = vsinq.f32.pop %v413
        %vm417 = vweird.f32 %v220
        %v418 = vadd.s32 %v414, 3
        %v419 = vand.u32 %v418, 3
        %vm420 = vcmp.lt.s32.totalorder %v419, 2
        %vm421 = vcmp.eq.s32.totalorder %v419, 0
        %v422 = vxor.u32 %v416, 2147483648
        %v423 = vsel %vm421, %v415, %v422
        %vm424 = vcmp.eq.s32.totalorder %v419, 2
        %v425 = vxor.u32 %v415, 2147483648
        %v426 = vsel %vm424, %v425, %v416
        %v427 = vsel %vm420, %v423, %v426
        %v428 = vsel %vm417, nan, %v427
        %429 = vst [vmem:[%s174] sm:$0xff] %v324
        %430 = vst [vmem:[%s174 + $0x8] sm:$0xff] %v428
        %s431 = sand.u32 %s93, 1
        %s432 = scalar_lea.sflag [#allocation3], %s431
        %s433 = sand.u32 %s93, 1
        %s434 = smul.addr %s433, 16
        %s435 = scalar_lea.vmem [#allocation2], %s434
        // Predicated region
        $region33: #{tpu_custom_call.1} parent=31 // pred_check
          %p436 = pneg %p103
        $region34: #{tpu_custom_call.1} parent=31 // pred_check_branch
          %438 = sbr.rel (%p436) target = $region36
        $region35: #{tpu_custom_call.1} parent=31 // pred_region
          %s439 = smul.u32 2, %s17
          %s440 = ssub.s32 5, %s439
          %p441 = scmp.lt.s32.totalorder %s440, 2
          %s442 = scalar_select %p441, %s440, 2
          %s443 = smul.u32 128, %s442
          %s445 = ssub.s32 256, %s443
          %446 = vsyncadd %s432, %s445
          %p447 = scmp.ne.s32.totalorder 0, %s443
          %s448 = smul.addr %s439, 128
          %s449 = scalar_lea.hbm %s3, %s448
          %s450 = smul.u32 %s442, 8
          %s451 = sshll.u32 %s450, 4
          %s452 = sshll.u32 %s435, 4
          %s453 = int_to_ptr.vmem [resolvable:$true] %s452
          %455 = dma.vmem_to_hbm [thread:$0]  (%p447), %s453, %s451, %s449, %s432
        $region36: #{tpu_custom_call.1} parent=31 // pred_fallthru
          _
      $region32: #{tpu_custom_call.1} parent=5 // pred_fallthru
        _
      %p456 = scmp.le.s32.totalorder 2, %s12
      // Predicated region
      $region37: #{tpu_custom_call.1} parent=5 // pred_check
        %p457 = pneg %p456
      $region38: #{tpu_custom_call.1} parent=5 // pred_check_branch
        %459 = sbr.rel (%p457) target = $region40
      $region39: #{tpu_custom_call.1} parent=5 // pred_region
        %s460 = ssub.s32 %s12, 2
        // Predicated region
        $region41: #{tpu_custom_call.1} parent=39 // pred_check
          %p461 = pneg %p109
        $region42: #{tpu_custom_call.1} parent=39 // pred_check_branch
          %463 = sbr.rel (%p461) target = $region44
        $region43: #{tpu_custom_call.1} parent=39 // pred_region
          %s464 = sand.u32 %s94, 1
          %s465 = scalar_lea.sflag [#allocation3], %s464
          %s466 = sand.u32 %s94, 1
          %s467 = smul.addr %s466, 16
          %s468 = scalar_lea.vmem [#allocation2], %s467
          %469 = dma.done %s465, 256
        $region44: #{tpu_custom_call.1} parent=39 // pred_fallthru
          _
      $region40: #{tpu_custom_call.1} parent=5 // pred_fallthru
        _
    $region6: #{tpu_custom_call.1} parent=1 // loop_footer
      %s16 = sadd.s32 1, %s12
    $region7: #{tpu_custom_call.1} parent=1 // loop_footer_branch
      %11 = sbr.rel target = $region3
    $region8: #{tpu_custom_call.1} parent=1 // loop_exit
      _
    %470 = vsyncpa [#allocation3], 1
    %s471 = scalar_lea.sflag [#allocation3], 1
    %472 = vsyncpa %s471, 1

</llo_original>
